<compile_context>
chip_gen: v7x
topology: tpu7x:2x2x1
jax: 0.10.0
libtpu: 0.0.40
codegen_flags: <defaults>
</compile_context>

<pallas_src>
import functools
import math

import jax
import jax.numpy as jnp
from jax import lax
from jax.experimental import pallas as pl
from jax.experimental.pallas import tpu as pltpu

_LANES = 128  # vreg lane width


def _mse_loss_kernel(x_ref, t_ref, out_ref, acc_ref, *,
                     mean, std, scale, exp_weighted, n_valid, tile_rows):
    step = pl.program_id(0)

    @pl.when(step == 0)
    def _init():
        acc_ref[...] = jnp.zeros_like(acc_ref)

    # fused denormalize (affine) + scale
    x = (x_ref[...] * std + mean) * scale
    t = (t_ref[...] * std + mean) * scale

    # validity mask: flat global index < n_valid (zero-padding contributes 0)
    row = lax.broadcasted_iota(jnp.int32, (tile_rows, _LANES), 0)
    col = lax.broadcasted_iota(jnp.int32, (tile_rows, _LANES), 1)
    gidx = (step * tile_rows + row) * _LANES + col
    valid = gidx < n_valid

    d = x - t
    term = d * d
    if exp_weighted:
        t_safe = jnp.where(valid, t, 0.0)          # keep exp() finite on padding
        term = (jnp.exp(t_safe) - 1.0) * term      # single EUP exp per element

    # vector-shaped accumulation (VPU only); scalar reduce deferred to the end
    acc_ref[...] += jnp.where(valid, term, 0.0)

    @pl.when(step == pl.num_programs(0) - 1)
    def _finalize():
        out_ref[...] = jnp.sum(acc_ref[...]).reshape(1, 1)


def mse_loss(inputs, targets, *, mean=0.0, std=1.0, scale=100.0,
             exp_weighted=False, max_tile_rows=512):
    """Pallas TPU implementation of MSELoss.forward (denormalize modeled as affine)."""
    inputs = jnp.asarray(inputs, jnp.float32)
    targets = jnp.asarray(targets, jnp.float32)
    assert inputs.shape == targets.shape

    n_batch = inputs.shape[0]     # PyTorch: N = input.size(0)
    n_elems = inputs.size         # total elements (for the plain-MSE mean)

    x = inputs.reshape(-1)
    t = targets.reshape(-1)

    # lane-dense (rows, 128) layout; rows padded to a sublane-aligned multiple
    # of the tile size. Tile sized to stay well inside scoped VMEM on all gens
    # (512 x 128 f32 = 256 KiB per operand, double-buffered).
    rows = pl.cdiv(n_elems, _LANES)
    rows = max(8, ((rows + 7) // 8) * 8)
    tr = min(int(max_tile_rows), rows)
    rows_p = ((rows + tr - 1) // tr) * tr
    pad = rows_p * _LANES - n_elems
    x = jnp.pad(x, (0, pad)).reshape(rows_p, _LANES)
    t = jnp.pad(t, (0, pad)).reshape(rows_p, _LANES)

    kernel = functools.partial(
        _mse_loss_kernel,
        mean=float(mean), std=float(std), scale=float(scale),
        exp_weighted=bool(exp_weighted),
        n_valid=int(n_elems), tile_rows=int(tr))

    total = pl.pallas_call(
        kernel,
        out_shape=jax.ShapeDtypeStruct((1, 1), jnp.float32),
        grid_spec=pltpu.PrefetchScalarGridSpec(
            num_scalar_prefetch=0,
            grid=(rows_p // tr,),
            in_specs=[pl.BlockSpec((tr, _LANES), lambda i: (i, 0)),
                      pl.BlockSpec((tr, _LANES), lambda i: (i, 0))],
            out_specs=pl.BlockSpec((1, 1), lambda i: (0, 0)),
            scratch_shapes=[pltpu.VMEM((tr, _LANES), jnp.float32)]),
        compiler_params=pltpu.CompilerParams(
            dimension_semantics=("arbitrary",)),   # reduction axis
    )(x, t)[0, 0]

    if exp_weighted:
        return total / (n_batch * (math.e - 1.0))
    return total / n_elems


def _mse_loss_ref(inputs, targets, *, mean=0.0, std=1.0, scale=100.0,
                  exp_weighted=False):
    """Pure-JAX reference mirroring the PyTorch forward."""
    x = (jnp.asarray(inputs, jnp.float32) * std + mean) * scale
    t = (jnp.asarray(targets, jnp.float32) * std + mean) * scale
    if exp_weighted:
        n = inputs.shape[0]
        return jnp.sum((jnp.exp(t) - 1.0) * (x - t) ** 2) / (n * (math.e - 1.0))
    return jnp.mean((x - t) ** 2)


if __name__ == "__main__":
    key = jax.random.PRNGKey(0)
    k1, k2 = jax.random.split(key)
    B, D = 8, 32
    inputs = jax.random.normal(k1, (B, D), dtype=jnp.float32)    # normalized preds
    targets = jax.random.uniform(k2, (B, D), dtype=jnp.float32)  # normalized labels

    cases = [
        # plain MSE path, default scale=100 and a non-trivial "denormalize"
        dict(exp_weighted=False, mean=0.5, std=2.0, scale=100.0),
        # exp-weighted path; keep denorm*scale moderate so exp() stays finite
        dict(exp_weighted=True, mean=0.0, std=1.0, scale=1.0),
    ]

    ok = True
    for cfg in cases:
        out = jax.block_until_ready(mse_loss(inputs, targets, **cfg))
        ref = jax.block_until_ready(_mse_loss_ref(inputs, targets, **cfg))
        ok = ok and bool(jnp.allclose(out, ref, rtol=1e-4, atol=1e-5))

    print("KERNEL_OK" if ok else "KERNEL_MISMATCH")
</pallas_src>

<mosaic_0001>
module attributes {stable_mosaic.version = 11 : i64} {
  func.func @_mse_loss_kernel(%arg0: i32, %arg1: memref<8x128xf32, #tpu.memory_space<vmem>>, %arg2: memref<8x128xf32, #tpu.memory_space<vmem>>, %arg3: memref<1x1xf32, #tpu.memory_space<vmem>>, %arg4: memref<8x128xf32, #tpu.memory_space<vmem>>) attributes {dimension_semantics = [#tpu.dimension_semantics<arbitrary>], iteration_bounds = array<i64: 1>, scalar_prefetch = 0 : i64, scratch_operands = 1 : i64, tpu.core_type = #tpu.core_type<tc>, window_params = [{transform_indices = @transform_0, window_bounds = array<i64: 8, 128>}, {transform_indices = @transform_1, window_bounds = array<i64: 8, 128>}, {pipeline_mode = #tpu.pipeline_mode<synchronous>, transform_indices = @transform_2, window_bounds = array<i64: 1, 1>}]} {
    %c0_i32 = arith.constant 0 : i32
    %0 = arith.cmpi eq, %arg0, %c0_i32 : i32
    %1 = arith.extui %0 : i1 to i32
    %c0_i32_0 = arith.constant 0 : i32
    %2 = arith.cmpi ne, %1, %c0_i32_0 : i32
    scf.if %2 {
      %cst_16 = arith.constant 0.000000e+00 : f32
      %37 = vector.broadcast %cst_16 : f32 to vector<8x128xf32>
      %c0_17 = arith.constant 0 : index
      %c0_18 = arith.constant 0 : index
      %38 = vector.load %arg4[%c0_17, %c0_18] : memref<8x128xf32, #tpu.memory_space<vmem>>, vector<8x128xf32>
      tpu.vector_store %arg4[%c0_17, %c0_18], %37 {strides = array<i32>} : memref<8x128xf32, #tpu.memory_space<vmem>>, vector<8x128xf32>,
    } else {
    }
    %c0 = arith.constant 0 : index
    %c0_1 = arith.constant 0 : index
    %3 = vector.load %arg1[%c0, %c0_1] : memref<8x128xf32, #tpu.memory_space<vmem>>, vector<8x128xf32>
    %cst = arith.constant 2.000000e+00 : f32
    %4 = vector.broadcast %cst : f32 to vector<8x128xf32>
    %5 = arith.mulf %3, %4 : vector<8x128xf32>
    %cst_2 = arith.constant 5.000000e-01 : f32
    %6 = vector.broadcast %cst_2 : f32 to vector<8x128xf32>
    %7 = arith.addf %5, %6 : vector<8x128xf32>
    %cst_3 = arith.constant 1.000000e+02 : f32
    %8 = vector.broadcast %cst_3 : f32 to vector<8x128xf32>
    %9 = arith.mulf %7, %8 : vector<8x128xf32>
    %c0_4 = arith.constant 0 : index
    %c0_5 = arith.constant 0 : index
    %10 = vector.load %arg2[%c0_4, %c0_5] : memref<8x128xf32, #tpu.memory_space<vmem>>, vector<8x128xf32>
    %cst_6 = arith.constant 2.000000e+00 : f32
    %11 = vector.broadcast %cst_6 : f32 to vector<8x128xf32>
    %12 = arith.mulf %10, %11 : vector<8x128xf32>
    %cst_7 = arith.constant 5.000000e-01 : f32
    %13 = vector.broadcast %cst_7 : f32 to vector<8x128xf32>
    %14 = arith.addf %12, %13 : vector<8x128xf32>
    %cst_8 = arith.constant 1.000000e+02 : f32
    %15 = vector.broadcast %cst_8 : f32 to vector<8x128xf32>
    %16 = arith.mulf %14, %15 : vector<8x128xf32>
    %17 = tpu.iota {dimensions = array<i32: 0>} : vector<8x128xi32>
    %18 = tpu.iota {dimensions = array<i32: 1>} : vector<8x128xi32>
    %c8_i32 = arith.constant 8 : i32
    %19 = arith.muli %arg0, %c8_i32 : i32
    %20 = vector.broadcast %19 : i32 to vector<8x128xi32>
    %21 = arith.addi %20, %17 : vector<8x128xi32>
    %c128_i32 = arith.constant 128 : i32
    %22 = vector.broadcast %c128_i32 : i32 to vector<8x128xi32>
    %23 = arith.muli %21, %22 : vector<8x128xi32>
    %24 = arith.addi %23, %18 : vector<8x128xi32>
    %c256_i32 = arith.constant 256 : i32
    %25 = vector.broadcast %c256_i32 : i32 to vector<8x128xi32>
    %26 = arith.cmpi slt, %24, %25 : vector<8x128xi32>
    %27 = arith.subf %9, %16 : vector<8x128xf32>
    %28 = arith.mulf %27, %27 : vector<8x128xf32>
    %c0_9 = arith.constant 0 : index
    %c0_10 = arith.constant 0 : index
    %29 = vector.load %arg4[%c0_9, %c0_10] : memref<8x128xf32, #tpu.memory_space<vmem>>, vector<8x128xf32>
    %cst_11 = arith.constant 0.000000e+00 : f32
    %30 = vector.broadcast %cst_11 : f32 to vector<8x128xf32>
    %31 = arith.select %26, %28, %30 : vector<8x128xi1>, vector<8x128xf32>
    %32 = arith.addf %29, %31 : vector<8x128xf32>
    %c0_12 = arith.constant 0 : index
    %c0_13 = arith.constant 0 : index
    %33 = vector.load %arg4[%c0_12, %c0_13] : memref<8x128xf32, #tpu.memory_space<vmem>>, vector<8x128xf32>
    tpu.vector_store %arg4[%c0_12, %c0_13], %32 {strides = array<i32>} : memref<8x128xf32, #tpu.memory_space<vmem>>, vector<8x128xf32>,
    %c0_i32_14 = arith.constant 0 : i32
    %34 = arith.cmpi eq, %arg0, %c0_i32_14 : i32
    %35 = arith.extui %34 : i1 to i32
    %c0_i32_15 = arith.constant 0 : i32
    %36 = arith.cmpi ne, %35, %c0_i32_15 : i32
    scf.if %36 {
      %c0_16 = arith.constant 0 : index
      %c0_17 = arith.constant 0 : index
      %37 = vector.load %arg4[%c0_16, %c0_17] : memref<8x128xf32, #tpu.memory_space<vmem>>, vector<8x128xf32>
      %38 = vector.shape_cast %37 : vector<8x128xf32> to vector<1x8x128xf32>
      %cst_18 = arith.constant dense<0.000000e+00> : vector<1xf32>
      %39 = vector.multi_reduction <add>, %38, %cst_18 [1, 2] : vector<1x8x128xf32> to vector<1xf32>
      %40 = vector.shape_cast %39 : vector<1xf32> to vector<1x1x1xf32>
      %41 = vector.extract %40[0, 0, 0] : f32 from vector<1x1x1xf32>
      %42 = vector.broadcast %41 : f32 to vector<1x1xf32>
      %c0_19 = arith.constant 0 : index
      %c0_20 = arith.constant 0 : index
      %43 = vector.load %arg3[%c0_19, %c0_20] : memref<1x1xf32, #tpu.memory_space<vmem>>, vector<1x1xf32>
      tpu.vector_store %arg3[%c0_19, %c0_20], %42 {strides = array<i32>} : memref<1x1xf32, #tpu.memory_space<vmem>>, vector<1x1xf32>,
    } else {
    }
    return
  }
  func.func @transform_0(%arg0: i32) -> (i32, i32) {
    %c0_i32 = arith.constant 0 : i32
    %c0_i32_0 = arith.constant 0 : i32
    return %arg0, %c0_i32 : i32, i32
  }
  func.func @transform_1(%arg0: i32) -> (i32, i32) {
    %c0_i32 = arith.constant 0 : i32
    %c0_i32_0 = arith.constant 0 : i32
    return %arg0, %c0_i32 : i32, i32
  }
  func.func @transform_2(%arg0: i32) -> (i32, i32) {
    %c0_i32 = arith.constant 0 : i32
    %c0_i32_0 = arith.constant 0 : i32
    %c0_i32_1 = arith.constant 0 : i32
    return %c0_i32, %c0_i32_0 : i32, i32
  }
}

</mosaic_0001>

<llo_original>
// kernel: tpu_custom_call.1
$region0: #{tpu_custom_call.1}
  #allocation0 [shape = 'u32[]', space=smem, size = 0x4, offset = 0x4, fixed_abs, tag = 'smem constant byte address 0x4 - core index']
  #allocation1 [shape = 'u32[144,128]{1,0:T(1,128)}', space=vmem, size = 0x12000, scoped, tag = 'internal scratch']
  #allocation2 [shape = 'f32[8,128]{1,0:T(8,128)}', space=vmem, size = 0x1000, scoped, tag = 'scratch operand']
  %s0 = inlined_call_operand.hbm [shape: f32[8,128], index: 0, kind: input, shape index: {}]
  %s1 = inlined_call_operand.hbm [shape: f32[8,128], index: 1, kind: input, shape index: {}]
  %s2 = inlined_call_operand.hbm [shape: f32[1,1], index: 2, kind: output, shape index: {}]
  %s3 = sld [smem:[#allocation0]]
  $region34: #{tpu_custom_call.1} parent=0
    _
  %s5 = ssub.s32 1, %s3
  %s6 = scalar_select 0, %s5, %s3
  $region1: #{tpu_custom_call.1} parent=0
    #allocation3 [shape = 'u8[4096]{0}', space=vmem, size = 0x1000, scoped, tag = 'input window, operand 0, single buffered']
    #allocation4 [shape = 's32[1]{0}', space=sflag, size = 0x4, scoped, tag = 'scoped memory for tpu_custom_call.1']
    #allocation5 [shape = 's32[1]{0}', space=sflag, size = 0x4, scoped, tag = 'scoped memory for tpu_custom_call.1']
    #allocation6 [shape = 'u8[4096]{0}', space=vmem, size = 0x1000, scoped, tag = 'input window, operand 1, single buffered']
    #allocation7 [shape = 's32[1]{0}', space=sflag, size = 0x4, scoped, tag = 'scoped memory for tpu_custom_call.1']
    #allocation8 [shape = 'u8[512]{0}', space=vmem, size = 0x400, scoped, tag = 'output window, operand 0, single buffered']
    %7 = vsyncpa [#allocation4], 0
    %8 = vsyncpa [#allocation7], 0
    %9 = vsyncpa [#allocation5], 0
    // Predicated region
    $region2: #{tpu_custom_call.1} parent=1 // pred_check
      _
    $region3: #{tpu_custom_call.1} parent=1 // pred_check_branch
      %11 = sbr.rel (0) target = $region5
    $region4: #{tpu_custom_call.1} parent=1 // pred_region
      %s13 = ssub.s32 128, 128
      %14 = vsyncadd [#allocation4], %s13
      %s16 = sshll.u32 [#allocation3], 4
      %s17 = int_to_ptr.vmem [resolvable:$true] %s16
      %19 = dma.hbm_to_vmem [thread:$0]  %s0, 128, %s17, [#allocation4]
    $region5: #{tpu_custom_call.1} parent=1 // pred_fallthru
      _
    // Predicated region
    $region6: #{tpu_custom_call.1} parent=1 // pred_check
      _
    $region7: #{tpu_custom_call.1} parent=1 // pred_check_branch
      %21 = sbr.rel (0) target = $region9
    $region8: #{tpu_custom_call.1} parent=1 // pred_region
      %s23 = ssub.s32 128, 128
      %24 = vsyncadd [#allocation7], %s23
      %s26 = sshll.u32 [#allocation6], 4
      %s27 = int_to_ptr.vmem [resolvable:$true] %s26
      %29 = dma.hbm_to_vmem [thread:$0]  %s1, 128, %s27, [#allocation7]
    $region9: #{tpu_custom_call.1} parent=1 // pred_fallthru
      _
    // Predicated region
    $region10: #{tpu_custom_call.1} parent=1 // pred_check
      _
    $region11: #{tpu_custom_call.1} parent=1 // pred_check_branch
      %31 = sbr.rel (0) target = $region13
    $region12: #{tpu_custom_call.1} parent=1 // pred_region
      %32 = dma.done [#allocation4], 128
    $region13: #{tpu_custom_call.1} parent=1 // pred_fallthru
      _
    // Predicated region
    $region14: #{tpu_custom_call.1} parent=1 // pred_check
      _
    $region15: #{tpu_custom_call.1} parent=1 // pred_check_branch
      %34 = sbr.rel (0) target = $region17
    $region16: #{tpu_custom_call.1} parent=1 // pred_region
      %35 = dma.done [#allocation7], 128
    $region17: #{tpu_custom_call.1} parent=1 // pred_fallthru
      _
    %p36 = scmp.eq.s32.totalorder 0, 0
    // Predicated region
    $region18: #{tpu_custom_call.1} parent=1 // pred_check
      %p37 = pneg %p36
    $region19: #{tpu_custom_call.1} parent=1 // pred_check_branch
      %39 = sbr.rel (%p37) target = $region21
    $region20: #{tpu_custom_call.1} parent=1 // pred_region
      %40 = vst [vmem:[#allocation2] sm:$0xff] 0.0
    $region21: #{tpu_custom_call.1} parent=1 // pred_fallthru
      _
    %v41 = vld [vmem:[#allocation3] sm:$0xff]
    %v42 = vmul.f32 %v41, 2.0
    %v43 = vadd.f32 %v42, 0.5
    %v44 = vmul.f32 %v43, 100.0
    %v45 = vld [vmem:[#allocation6] sm:$0xff]
    %v46 = vmul.f32 %v45, 2.0
    %v47 = vadd.f32 %v46, 0.5
    %v48 = vmul.f32 %v47, 100.0
    %v49 = vlaneseq
    %v50 = vshrl.u32 %v49, 7
    %v51 = vlaneseq
    %v52 = vand.u32 %v51, 127
    %s53 = smul.u32 0, 8
    %v54 = vstv %s53
    %v55 = vadd.s32 %v54, %v50
    %v56 = vmul.u32 %v55, 128
    %v57 = vadd.s32 %v56, %v52
    %vm58 = vcmp.lt.s32.totalorder %v57, 256
    %v59 = vsub.f32 %v44, %v48
    %v60 = vmul.f32 %v59, %v59
    %v61 = vld [vmem:[#allocation2] sm:$0xff]
    %v62 = vsel %vm58, %v60, 0.0
    %v63 = vadd.f32 %v61, %v62
    %64 = vst [vmem:[#allocation2] sm:$0xff] %v63
    // Predicated region
    $region22: #{tpu_custom_call.1} parent=1 // pred_check
      %p65 = pneg %p36
    $region23: #{tpu_custom_call.1} parent=1 // pred_check_branch
      %67 = sbr.rel (%p65) target = $region25
    $region24: #{tpu_custom_call.1} parent=1 // pred_region
      %v68 = vld [vmem:[#allocation2] sm:$0xff]
      %69 = vadd.xlane.f32.xlu0 %v68
      %v70 = vpop.xlane.xlu0 %69
      %v71 = vrot.slane %v70, 4
      %v72 = vadd.f32 %v70, %v71
      %v73 = vrot.slane %v72, 2
      %v74 = vadd.f32 %v72, %v73
      %v75 = vrot.slane %v74, 1
      %v76 = vadd.f32 %v74, %v75
      %s77 = vtos %v76
      %v78 = vstv %s77
      %vm79 = vcmask 0
      %80 = vst.msk [vmem:[#allocation8] sm:$0x1] %vm79, %v78
    $region25: #{tpu_custom_call.1} parent=1 // pred_fallthru
      _
    // Predicated region
    $region26: #{tpu_custom_call.1} parent=1 // pred_check
      _
    $region27: #{tpu_custom_call.1} parent=1 // pred_check_branch
      %82 = sbr.rel (0) target = $region29
    $region28: #{tpu_custom_call.1} parent=1 // pred_region
      %s84 = ssub.s32 16, 16
      %85 = vsyncadd [#allocation5], %s84
      %s87 = sshll.u32 [#allocation8], 4
      %s88 = int_to_ptr.vmem [resolvable:$true] %s87
      %90 = dma.vmem_to_hbm [thread:$0]  %s88, 16, %s2, [#allocation5]
    $region29: #{tpu_custom_call.1} parent=1 // pred_fallthru
      _
    // Predicated region
    $region30: #{tpu_custom_call.1} parent=1 // pred_check
      _
    $region31: #{tpu_custom_call.1} parent=1 // pred_check_branch
      %92 = sbr.rel (0) target = $region33
    $region32: #{tpu_custom_call.1} parent=1 // pred_region
      %93 = dma.done [#allocation5], 16
    $region33: #{tpu_custom_call.1} parent=1 // pred_fallthru
      _
    %94 = vsyncpa [#allocation4], 1
    %95 = vsyncpa [#allocation7], 1
    %96 = vsyncpa [#allocation5], 1

</llo_original>
